<compile_context>
chip_gen: v6e
topology: v6e:2x2x1
jax: 0.10.0
libtpu: 0.0.40
codegen_flags: <defaults>
</compile_context>

<pallas_src>
import jax
import jax.numpy as jnp
from jax import lax
from jax.experimental import pallas as pl
from jax.experimental.pallas import tpu as pltpu


_TARGET_BLOCK_BYTES = 8 << 20          # ~8 MiB blocks (review: 4-8 MiB, v7x-friendly)
_VMEM_CAP_BYTES = 48 << 20             # stay under v7x's 64 MiB physical VMEM


def _round_up(x, m):
    return ((x + m - 1) // m) * m


def _pick_batch_tile(B, row_bytes, pack, target_bytes=_TARGET_BLOCK_BYTES):
    """Batch tile: ~target-sized block, sublane-pack aligned, no TB->1 collapse."""
    if B * row_bytes <= target_bytes:
        tb = B
    else:
        tb = max(1, target_bytes // max(row_bytes, 1))
        tb = max(pack, (tb // pack) * pack)     # never collapse below one sublane pack
        tb = min(tb, B)
    # Prefer >=2 grid steps so dimension_semantics=("parallel",) can shard the
    # batch tiles across v7x's two TensorCores.
    if tb == B and B >= 2 * pack:
        half = (B + 1) // 2
        tb = max(pack, (half // pack) * pack)
    return tb


def make_truncation(max_layer: int = 8, thresh: float = 0.7):
    """Returns a callable (x, avg_latent) -> truncated latents, computed in Pallas."""
    thresh = float(thresh)

    def apply(x, avg_latent):
        B, L, D = x.shape
        ml = int(max(0, min(max_layer, L)))
        if ml == 0:
            # Nothing is truncated; forward is the identity.
            return x

        dtype = x.dtype
        itemsize = jnp.dtype(dtype).itemsize
        pack = 8 * max(1, 4 // itemsize)        # sublane pack: 8 f32, 16 bf16, 32 int8
        LD = L * D

        # Column extent of the truncated region in the flattened (B, L*D) view.
        w_raw = ml * D
        if w_raw % 128 == 0:
            W = w_raw                            # exact boundary (always true if D%128==0)
            need_mask = False
        else:
            W = min(_round_up(w_raw, 128), LD)   # pad to a lane multiple (or full row)
            need_mask = W != w_raw

        x2 = x.reshape(B, LD)

        # Small (1, W) avg row covering exactly the block's columns; cast to x.dtype
        # so the lerp runs in x's precision (matches doing the op in x.dtype).
        n_rep = -(-W // D)
        avg_row = jnp.tile(avg_latent.astype(dtype).reshape(-1), n_rep)[:W].reshape(1, W)

        TB = _pick_batch_tile(B, W * itemsize, pack)
        grid = (pl.cdiv(B, TB),)                 # ragged last block is fine (elementwise)

        block_bytes = TB * W * itemsize
        vmem_need = 4 * block_bytes + 2 * W * itemsize + (1 << 20)  # 2x in + 2x out + avg + slack
        vmem_limit = int(min(max(vmem_need, 16 << 20), _VMEM_CAP_BYTES))

        def kernel(x_ref, avg_ref, o_ref):
            t = jnp.float32(thresh)
            xb = x_ref[...].astype(jnp.float32)              # (TB, W)
            ab = avg_ref[...].astype(jnp.float32)            # (1, W) -> sublane broadcast
            interp = t * xb + (1.0 - t) * ab                 # lerp(avg, x, t)
            if need_mask:
                # Lane-index mask, built at (1, W) and broadcast by jnp.where;
                # only the padded boundary columns fall back to x.
                col = lax.broadcasted_iota(jnp.int32, (1, W), 1)
                interp = jnp.where(col < w_raw, interp, xb)
            o_ref[...] = interp.astype(o_ref.dtype)

        out2 = pl.pallas_call(
            kernel,
            out_shape=jax.ShapeDtypeStruct((B, LD), dtype),
            grid_spec=pltpu.PrefetchScalarGridSpec(
                num_scalar_prefetch=0,
                grid=grid,
                in_specs=[
                    pl.BlockSpec((TB, W), lambda i: (i, 0)),   # only cols [0, W) of x
                    pl.BlockSpec((1, W), lambda i: (0, 0)),    # avg row, resident
                ],
                out_specs=pl.BlockSpec((TB, W), lambda i: (i, 0)),
            ),
            # Columns >= W (layers >= max_layer) are never touched by the kernel;
            # they are preserved through the output<->input alias (in-place when the
            # caller donates x, via XLA's defensive copy otherwise).
            input_output_aliases={0: 0},
            compiler_params=pltpu.CompilerParams(
                dimension_semantics=("parallel",),
                vmem_limit_bytes=vmem_limit,
            ),
        )(x2, avg_row)

        return out2.reshape(B, L, D)

    return apply


def truncation_ref(x, avg_latent, max_layer=8, thresh=0.7):
    """Pure-JAX reference mirroring the PyTorch forward."""
    avg = avg_latent.reshape(1, 1, -1)
    interp = avg + thresh * (x - avg)
    mask = (jnp.arange(x.shape[1]) < max_layer).reshape(1, -1, 1)
    return jnp.where(mask, interp, x)


if __name__ == "__main__":
    key = jax.random.PRNGKey(0)
    k_x, k_avg, k_x2, k_x3, k_avg3 = jax.random.split(key, 5)
    THRESH = 0.7

    # Config 1: StyleGAN-ish W+ latents (D % 128 == 0) -> exact-boundary aliased path.
    B, L, D = 2, 10, 128
    MAX_LAYER = 8
    x = jax.random.normal(k_x, (B, L, D), dtype=jnp.float32)
    avg_latent = jax.random.normal(k_avg, (D,), dtype=jnp.float32)
    fn1 = make_truncation(max_layer=MAX_LAYER, thresh=THRESH)

    ref1 = truncation_ref(x, avg_latent, MAX_LAYER, THRESH)
    out1 = jax.block_until_ready(fn1(x, avg_latent))          # non-donated: layers >= ml
    assert out1.shape == (B, L, D)                            # must still equal x here
    assert jnp.allclose(out1, ref1, atol=1e-5, rtol=1e-5), "mismatch (non-donated path)"

    # Same config, donated input -> true in-place aliasing (no defensive copy).
    x_donate = x + 0.0
    out1d = jax.block_until_ready(jax.jit(fn1, donate_argnums=(0,))(x_donate, avg_latent))
    assert jnp.allclose(out1d, ref1, atol=1e-5, rtol=1e-5), "mismatch (donated path)"

    # Config 2: max_layer=5 with D=128 -> 5*128 cols is lane-aligned, still exact path
    # (the old masked full-width fallback is no longer needed for D % 128 == 0).
    x2 = jax.random.normal(k_x2, (4, 10, 128), dtype=jnp.float32)
    fn2 = make_truncation(max_layer=5, thresh=THRESH)
    ref2 = truncation_ref(x2, avg_latent, 5, THRESH)
    out2 = jax.block_until_ready(fn2(x2, avg_latent))
    assert jnp.allclose(out2, ref2, atol=1e-5, rtol=1e-5), "mismatch (max_layer=5 path)"

    # Config 3: D not a multiple of 128 -> masked-boundary aliased path.
    x3 = jax.random.normal(k_x3, (4, 6, 96), dtype=jnp.float32)
    avg3 = jax.random.normal(k_avg3, (96,), dtype=jnp.float32)
    fn3 = make_truncation(max_layer=3, thresh=THRESH)
    ref3 = truncation_ref(x3, avg3, 3, THRESH)
    out3 = jax.block_until_ready(fn3(x3, avg3))
    assert jnp.allclose(out3, ref3, atol=1e-5, rtol=1e-5), "mismatch (masked-boundary path)"

    print("KERNEL_OK")
</pallas_src>

<mosaic_0001>
module attributes {stable_mosaic.version = 11 : i64} {
  func.func @kernel(%arg0: i32, %arg1: memref<2x1024xf32, #tpu.memory_space<vmem>>, %arg2: memref<1x1024xf32, #tpu.memory_space<vmem>>, %arg3: memref<2x1024xf32, #tpu.memory_space<vmem>>) attributes {dimension_semantics = [#tpu.dimension_semantics<parallel>], iteration_bounds = array<i64: 1>, scalar_prefetch = 0 : i64, scratch_operands = 0 : i64, tpu.core_type = #tpu.core_type<tc>, window_params = [{transform_indices = @transform_0, window_bounds = array<i64: 2, 1024>}, {pipeline_mode = #tpu.pipeline_mode<synchronous>, transform_indices = @transform_1, window_bounds = array<i64: 1, 1024>}, {transform_indices = @transform_2, window_bounds = array<i64: 2, 1024>}]} {
    %c0 = arith.constant 0 : index
    %c0_0 = arith.constant 0 : index
    %0 = vector.load %arg1[%c0, %c0_0] : memref<2x1024xf32, #tpu.memory_space<vmem>>, vector<2x1024xf32>
    %c0_1 = arith.constant 0 : index
    %c0_2 = arith.constant 0 : index
    %1 = vector.load %arg2[%c0_1, %c0_2] : memref<1x1024xf32, #tpu.memory_space<vmem>>, vector<1x1024xf32>
    %cst = arith.constant 0.699999988 : f32
    %2 = vector.broadcast %cst : f32 to vector<2x1024xf32>
    %3 = arith.mulf %2, %0 : vector<2x1024xf32>
    %cst_3 = arith.constant 1.000000e+00 : f32
    %cst_4 = arith.constant 0.699999988 : f32
    %4 = arith.subf %cst_3, %cst_4 : f32
    %5 = vector.broadcast %4 : f32 to vector<1x1024xf32>
    %6 = arith.mulf %5, %1 : vector<1x1024xf32>
    %7 = vector.broadcast %6 : vector<1x1024xf32> to vector<2x1024xf32>
    %8 = arith.addf %3, %7 : vector<2x1024xf32>
    %c0_5 = arith.constant 0 : index
    %c0_6 = arith.constant 0 : index
    %9 = vector.load %arg3[%c0_5, %c0_6] : memref<2x1024xf32, #tpu.memory_space<vmem>>, vector<2x1024xf32>
    tpu.vector_store %arg3[%c0_5, %c0_6], %8 {strides = array<i32>} : memref<2x1024xf32, #tpu.memory_space<vmem>>, vector<2x1024xf32>,
    return
  }
  func.func @transform_0(%arg0: i32) -> (i32, i32) {
    %c0_i32 = arith.constant 0 : i32
    %c0_i32_0 = arith.constant 0 : i32
    return %arg0, %c0_i32 : i32, i32
  }
  func.func @transform_1(%arg0: i32) -> (i32, i32) {
    %c0_i32 = arith.constant 0 : i32
    %c0_i32_0 = arith.constant 0 : i32
    %c0_i32_1 = arith.constant 0 : i32
    return %c0_i32, %c0_i32_0 : i32, i32
  }
  func.func @transform_2(%arg0: i32) -> (i32, i32) {
    %c0_i32 = arith.constant 0 : i32
    %c0_i32_0 = arith.constant 0 : i32
    return %arg0, %c0_i32 : i32, i32
  }
}

</mosaic_0001>

<llo_original>
// kernel: tpu_custom_call.1
$region0: #{tpu_custom_call.1}
  #allocation0 [shape = 'u32[]', space=smem, size = 0x4, offset = 0x4, fixed_abs, tag = 'smem constant byte address 0x4 - core index']
  #allocation1 [shape = 'u32[144,128]{1,0:T(1,128)}', space=vmem, size = 0x12000, scoped, tag = 'internal scratch']
  %s0 = inlined_call_operand.hbm [shape: f32[2,1280], index: 0, kind: input, shape index: {}, may-alias: {0,2}]
  %s1 = inlined_call_operand.vmem [shape: f32[1,1024], index: 1, kind: input, shape index: {}]
  %s2 = inlined_call_operand.hbm [shape: f32[2,1280], index: 2, kind: output, shape index: {}, may-alias: {0,2}]
  %s3 = sld [smem:[#allocation0]]
  $region22: #{tpu_custom_call.1} parent=0
    _
  %s5 = ssub.s32 1, %s3
  %s6 = scalar_select 0, %s5, %s3
  $region1: #{tpu_custom_call.1} parent=0
    #allocation2 [shape = 'u8[8192]{0}', space=vmem, size = 0x2000, scoped, tag = 'input window, operand 0, single buffered']
    #allocation3 [shape = 's32[1]{0}', space=sflag, size = 0x4, scoped, tag = 'scoped memory for tpu_custom_call.1']
    #allocation4 [shape = 's32[1]{0}', space=sflag, size = 0x4, scoped, tag = 'scoped memory for tpu_custom_call.1']
    #allocation5 [shape = 'u8[8192]{0}', space=vmem, size = 0x2000, scoped, tag = 'output window, operand 0, single buffered']
    %7 = vsyncpa [#allocation3], 0
    %8 = vsyncpa [#allocation4], 0
    // Predicated region
    $region2: #{tpu_custom_call.1} parent=1 // pred_check
      _
    $region3: #{tpu_custom_call.1} parent=1 // pred_check_branch
      %10 = sbr.rel (0) target = $region5
    $region4: #{tpu_custom_call.1} parent=1 // pred_region
      %s12 = ssub.s32 256, 256
      %13 = vsyncadd [#allocation3], %s12
      %s15 = sshll.u32 [#allocation2], 4
      %s16 = int_to_ptr.vmem [resolvable:$true] %s15
      %18 = dma.hbm_to_vmem [thread:$0]  %s0, 256, %s16, [#allocation3]
    $region5: #{tpu_custom_call.1} parent=1 // pred_fallthru
      _
    // Predicated region
    $region6: #{tpu_custom_call.1} parent=1 // pred_check
      _
    $region7: #{tpu_custom_call.1} parent=1 // pred_check_branch
      %20 = sbr.rel (0) target = $region9
    $region8: #{tpu_custom_call.1} parent=1 // pred_region
      _
    $region9: #{tpu_custom_call.1} parent=1 // pred_fallthru
      _
    // Predicated region
    $region10: #{tpu_custom_call.1} parent=1 // pred_check
      _
    $region11: #{tpu_custom_call.1} parent=1 // pred_check_branch
      %22 = sbr.rel (0) target = $region13
    $region12: #{tpu_custom_call.1} parent=1 // pred_region
      %23 = dma.done [#allocation3], 256
    $region13: #{tpu_custom_call.1} parent=1 // pred_fallthru
      _
    %v24 = vld [vmem:[#allocation2] sm:$0xff]
    %v25 = vld [vmem:[#allocation2 + $0x8] sm:$0xff]
    %v26 = vld [vmem:[%s1] sm:$0xff]
    %v27 = vmul.f32 %v24, 0.7
    %v28 = vmul.f32 %v25, 0.7
    %v29 = vmul.f32 %v26, 0.3
    %v31 = vlaneseq
    %v32 = vshrl.u32 %v31, 7
    %v33 = vsub.s32 0, %v32
    %v34 = vrot.slane %v29, %v33
    %v35 = vlaneseq
    %v36 = vshrl.u32 %v35, 7
    %v37 = vsub.s32 1, %v36
    %v38 = vrot.slane %v29, %v37
    %v39 = vlaneseq
    %v40 = vshrl.u32 %v39, 7
    %v41 = vsub.s32 2, %v40
    %v42 = vrot.slane %v29, %v41
    %v43 = vlaneseq
    %v44 = vshrl.u32 %v43, 7
    %v45 = vsub.s32 3, %v44
    %v46 = vrot.slane %v29, %v45
    %v47 = vlaneseq
    %v48 = vshrl.u32 %v47, 7
    %v49 = vsub.s32 4, %v48
    %v50 = vrot.slane %v29, %v49
    %v51 = vlaneseq
    %v52 = vshrl.u32 %v51, 7
    %v53 = vsub.s32 5, %v52
    %v54 = vrot.slane %v29, %v53
    %v55 = vlaneseq
    %v56 = vshrl.u32 %v55, 7
    %v57 = vsub.s32 6, %v56
    %v58 = vrot.slane %v29, %v57
    %v59 = vlaneseq
    %v60 = vshrl.u32 %v59, 7
    %v61 = vsub.s32 7, %v60
    %v62 = vrot.slane %v29, %v61
    %v63 = vcombine.low %v34, %v38
    %v64 = vcombine.low %v42, %v46
    %v66 = vunpack.c.l.s4 1983009808
    %v67 = vunpack.c.0.s8 %v66
    %v68 = vlaneseq
    %v69 = vshrl.u32 %v68, 7
    %v70 = vsub.s32 %v67, %v69
    %v71 = vrot.slane %v63, %v70
    %v73 = vunpack.c.l.s4 1983009808
    %v74 = vunpack.c.0.s8 %v73
    %v75 = vlaneseq
    %v76 = vshrl.u32 %v75, 7
    %v77 = vsub.s32 %v74, %v76
    %v78 = vrot.slane %v64, %v77
    %v79 = vcombine.low %v71, %v78
    %v80 = vcombine.low %v50, %v54
    %v81 = vcombine.low %v58, %v62
    %v83 = vunpack.c.l.s4 1983009808
    %v84 = vunpack.c.0.s8 %v83
    %v85 = vlaneseq
    %v86 = vshrl.u32 %v85, 7
    %v87 = vsub.s32 %v84, %v86
    %v88 = vrot.slane %v80, %v87
    %v90 = vunpack.c.l.s4 1983009808
    %v91 = vunpack.c.0.s8 %v90
    %v92 = vlaneseq
    %v93 = vshrl.u32 %v92, 7
    %v94 = vsub.s32 %v91, %v93
    %v95 = vrot.slane %v81, %v94
    %v96 = vcombine.low %v88, %v95
    %v99 = vadd.f32 %v27, %v79
    %v100 = vadd.f32 %v28, %v96
    %101 = vst [vmem:[#allocation5] sm:$0xff] %v99
    %102 = vst [vmem:[#allocation5 + $0x8] sm:$0xff] %v100
    // Predicated region
    $region14: #{tpu_custom_call.1} parent=1 // pred_check
      _
    $region15: #{tpu_custom_call.1} parent=1 // pred_check_branch
      %104 = sbr.rel (0) target = $region17
    $region16: #{tpu_custom_call.1} parent=1 // pred_region
      %s106 = ssub.s32 256, 256
      %107 = vsyncadd [#allocation4], %s106
      %s109 = sshll.u32 [#allocation5], 4
      %s110 = int_to_ptr.vmem [resolvable:$true] %s109
      %112 = dma.vmem_to_hbm [thread:$0]  %s110, 256, %s2, [#allocation4]
    $region17: #{tpu_custom_call.1} parent=1 // pred_fallthru
      _
    // Predicated region
    $region18: #{tpu_custom_call.1} parent=1 // pred_check
      _
    $region19: #{tpu_custom_call.1} parent=1 // pred_check_branch
      %114 = sbr.rel (0) target = $region21
    $region20: #{tpu_custom_call.1} parent=1 // pred_region
      %115 = dma.done [#allocation4], 256
    $region21: #{tpu_custom_call.1} parent=1 // pred_fallthru
      _
    %116 = vsyncpa [#allocation3], 1
    %117 = vsyncpa [#allocation4], 1

</llo_original>
